<compile_context>
chip_gen: v7x
topology: tpu7x:2x2x1
jax: 0.10.0
libtpu: 0.0.40
codegen_flags: <defaults>
</compile_context>

<pallas_src>
import jax
import jax.numpy as jnp
from jax.experimental import pallas as pl
from jax.experimental.pallas import tpu as pltpu

LOG_SIG_MAX = 2.0
LOG_SIG_MIN = -4.0

# ---- model hyper-parameters (small, consistent with the module) ----
TIME_FRAME = 5
OBS_PER_FRAME = 32
OBS_DIM = TIME_FRAME * OBS_PER_FRAME      # 160
GOAL_DIM = 16
IN_DIM = OBS_DIM + GOAL_DIM               # 176
HIDDEN_DIM = 64
OUT_DIM = 16                              # trunk out_dim; chunk(2) -> act_dim = 8
ACT_DIM = OUT_DIM // 2
NUM_LAYERS = 2
BATCH = 8
PRE_N = TIME_FRAME * OBS_PER_FRAME + HIDDEN_DIM   # 224 (xproj frames || goal_proj)


def _mm(a, w):
    """bf16 x bf16 MXU matmul with f32 accumulation."""
    return jnp.dot(a.astype(jnp.bfloat16), w, preferred_element_type=jnp.float32)


def _forward(state, w_pre, w_loop, w_trunk, bias):
    """Shared math: runs identically as the Pallas kernel body and as the JAX reference.

    state   [B, 176] f32
    w_pre   [176, 224] bf16  (block-diag W_ih^0 x5 || W1_goal)
    w_loop  [96, 32]  bf16  (rows: Whh0 | Wih1 | Whh1)
    w_trunk [160, 64] bf16  (rows: W1_h | W2 | W3 zero-padded to 64 cols)
    bias    [4, 224]  f32   (rows: pre_bias | b1 | bb2 | bb3)
    """
    P, T, H, O = OBS_PER_FRAME, TIME_FRAME, HIDDEN_DIM, OUT_DIM

    # One fused pre-projection: all five x_t @ Wih0 + b0, plus goal @ W1_g + bb1.
    pre = _mm(state, w_pre) + bias[0:1, :]                # [B, 224]
    goal_proj = pre[:, T * P:]                            # [B, 64] = goal @ W1_g + bb1

    whh0 = w_loop[0:P, :]                                 # [32, 32]
    wih1 = w_loop[P:2 * P, :]                             # [32, 32]
    w1stack = w_loop[P:3 * P, :]                          # [64, 32] = [Wih1; Whh1]
    b1b = jnp.broadcast_to(bias[1:2, 0:P], (BATCH, P))    # hoisted: one broadcast total

    # t = 0 (h0 = h1 = 0): recurrent terms vanish -> 1 matmul.  Frames are fed in
    # reverse order (== obs.reshape(B,T,P).flip(1)).
    h0 = jnp.tanh(pre[:, (T - 1) * P:T * P])
    h1 = jnp.tanh(_mm(h0, wih1) + b1b)

    # t = 1..T-1: 2 matmuls per step (layer-0 recurrent, fused layer-1).
    for t in range(1, T):
        f = T - 1 - t
        xp = pre[:, f * P:(f + 1) * P]
        h0 = jnp.tanh(xp + _mm(h0, whh0))
        h01 = jnp.concatenate([h0, h1], axis=1)           # [B, 64]
        h1 = jnp.tanh(_mm(h01, w1stack) + b1b)

    # Trunk MLP on concat([h1, goal]); the goal half of layer 1 (incl. bb1) was
    # already computed in the pre-projection, so only h1 @ W1_h remains.
    w1_h = w_trunk[0:P, :]                                # [32, 64]
    w2 = w_trunk[P:P + H, :]                              # [64, 64]
    w3 = w_trunk[P + H:P + 2 * H, :]                      # [64, 64] (cols O.. are zero)
    z = jnp.maximum(_mm(h1, w1_h) + goal_proj, 0.0)
    z = jnp.maximum(_mm(z, w2) + bias[2:3, 0:H], 0.0)
    out = _mm(z, w3)[:, :O] + bias[3:4, 0:O]              # [B, 16]

    mu = out[:, :ACT_DIM]
    log_std = jnp.tanh(out[:, ACT_DIM:])
    log_std = LOG_SIG_MIN + 0.5 * (LOG_SIG_MAX - LOG_SIG_MIN) * (log_std + 1.0)
    std = jnp.exp(log_std)
    return jnp.concatenate([mu, std], axis=1)             # [B, 16] = [mu | std]


def actor_kernel(state_ref, w_pre_ref, w_loop_ref, w_trunk_ref, bias_ref, out_ref):
    out_ref[...] = _forward(state_ref[...], w_pre_ref[...], w_loop_ref[...],
                            w_trunk_ref[...], bias_ref[...])


def actor_forward(state, packed):
    vmem = pl.BlockSpec(memory_space=pltpu.MemorySpace.VMEM)
    out = pl.pallas_call(
        actor_kernel,
        out_shape=jax.ShapeDtypeStruct((BATCH, 2 * ACT_DIM), jnp.float32),
        in_specs=[vmem] * (1 + len(packed)),
        out_specs=vmem,
    )(state, *packed)
    return out[:, :ACT_DIM], out[:, ACT_DIM:]


# ------------------------- host-side parameter construction -------------------------

def _uniform(key, shape, fan_in):
    bound = 1.0 / jnp.sqrt(jnp.float32(fan_in))
    return jax.random.uniform(key, shape, jnp.float32, -bound, bound)


def make_params(seed=0):
    """Deterministic PyTorch-style U(-1/sqrt(k), 1/sqrt(k)) init.
    Weights are stored transposed ([in, out]); the two RNN biases per layer
    (b_ih + b_hh) are pre-summed into one [1, hidden] bias."""
    keys = jax.random.split(jax.random.PRNGKey(seed), 16)
    P, G, H, O = OBS_PER_FRAME, GOAL_DIM, HIDDEN_DIM, OUT_DIM
    ki = iter(keys)
    # RNN layer 0
    wih0 = _uniform(next(ki), (P, P), P)
    whh0 = _uniform(next(ki), (P, P), P)
    b0 = _uniform(next(ki), (1, P), P) + _uniform(next(ki), (1, P), P)
    # RNN layer 1
    wih1 = _uniform(next(ki), (P, P), P)
    whh1 = _uniform(next(ki), (P, P), P)
    b1 = _uniform(next(ki), (1, P), P) + _uniform(next(ki), (1, P), P)
    # trunk MLP: (P+G) -> H -> H -> O
    w1 = _uniform(next(ki), (P + G, H), P + G)
    bb1 = _uniform(next(ki), (1, H), P + G)
    w2 = _uniform(next(ki), (H, H), H)
    bb2 = _uniform(next(ki), (1, H), H)
    w3 = _uniform(next(ki), (H, O), H)
    bb3 = _uniform(next(ki), (1, O), H)
    return (wih0, whh0, b0, wih1, whh1, b1, w1, bb1, w2, bb2, w3, bb3)


def pack_params(raw):
    """Pack the 12 raw arrays into 3 bf16 weight buffers + 1 f32 bias buffer."""
    (wih0, whh0, b0, wih1, whh1, b1, w1, bb1, w2, bb2, w3, bb3) = raw
    P, G, H, O, T = OBS_PER_FRAME, GOAL_DIM, HIDDEN_DIM, OUT_DIM, TIME_FRAME
    w1_h, w1_g = w1[:P, :], w1[P:, :]

    # Pre-projection weight: block-diag(wih0 x T) for the obs lanes, W1_goal for goal.
    w_pre = jnp.zeros((IN_DIM, PRE_N), jnp.float32)
    for f in range(T):
        w_pre = w_pre.at[f * P:(f + 1) * P, f * P:(f + 1) * P].set(wih0)
    w_pre = w_pre.at[OBS_DIM:, T * P:].set(w1_g)

    # Loop weights: Whh0 | Wih1 | Whh1  -> [96, 32]
    w_loop = jnp.concatenate([whh0, wih1, whh1], axis=0)

    # Trunk weights: W1_h | W2 | W3 (zero-padded to 64 output cols) -> [160, 64]
    w3_pad = jnp.zeros((H, H), jnp.float32).at[:, :O].set(w3)
    w_trunk = jnp.concatenate([w1_h, w2, w3_pad], axis=0)

    # Biases: row 0 = pre_bias (b0 tiled x T || bb1), row 1 = b1, row 2 = bb2, row 3 = bb3.
    bias = jnp.zeros((4, PRE_N), jnp.float32)
    bias = bias.at[0, :T * P].set(jnp.tile(b0[0], (T,)))
    bias = bias.at[0, T * P:].set(bb1[0])
    bias = bias.at[1, :P].set(b1[0])
    bias = bias.at[2, :H].set(bb2[0])
    bias = bias.at[3, :O].set(bb3[0])

    bf16 = jnp.bfloat16
    return (w_pre.astype(bf16), w_loop.astype(bf16), w_trunk.astype(bf16), bias)


if __name__ == "__main__":
    key = jax.random.PRNGKey(0)
    state = jax.random.normal(key, (BATCH, IN_DIM), jnp.float32)
    packed = pack_params(make_params(seed=0))

    mu, std = jax.jit(actor_forward)(state, packed)
    jax.block_until_ready((mu, std))

    # Pure-JAX reference mirroring the kernel math (same packed bf16 weights).
    ref = _forward(state, *packed)
    mu_ref, std_ref = ref[:, :ACT_DIM], ref[:, ACT_DIM:]

    assert mu.shape == (BATCH, ACT_DIM) and std.shape == (BATCH, ACT_DIM)
    assert bool(jnp.all(jnp.isfinite(mu))) and bool(jnp.all(std > 0))
    assert bool(jnp.allclose(mu, mu_ref, atol=2e-2, rtol=2e-2))
    assert bool(jnp.allclose(std, std_ref, atol=2e-2, rtol=2e-2))
    print("KERNEL_OK")
</pallas_src>

<mosaic_0001>
module attributes {stable_mosaic.version = 11 : i64} {
  func.func @actor_kernel(%arg0: memref<8x176xf32, #tpu.memory_space<vmem>>, %arg1: memref<176x224xbf16, #tpu.memory_space<vmem>>, %arg2: memref<96x32xbf16, #tpu.memory_space<vmem>>, %arg3: memref<160x64xbf16, #tpu.memory_space<vmem>>, %arg4: memref<4x224xf32, #tpu.memory_space<vmem>>, %arg5: memref<8x16xf32, #tpu.memory_space<vmem>>) attributes {dimension_semantics = [], scalar_prefetch = 0 : i64, scratch_operands = 0 : i64, tpu.core_type = #tpu.core_type<tc>} {
    %c0 = arith.constant 0 : index
    %c0_0 = arith.constant 0 : index
    %0 = vector.load %arg0[%c0, %c0_0] : memref<8x176xf32, #tpu.memory_space<vmem>>, vector<8x176xf32>
    %c0_1 = arith.constant 0 : index
    %c0_2 = arith.constant 0 : index
    %1 = vector.load %arg1[%c0_1, %c0_2] : memref<176x224xbf16, #tpu.memory_space<vmem>>, vector<176x224xbf16>
    %c0_3 = arith.constant 0 : index
    %c0_4 = arith.constant 0 : index
    %2 = vector.load %arg2[%c0_3, %c0_4] : memref<96x32xbf16, #tpu.memory_space<vmem>>, vector<96x32xbf16>
    %c0_5 = arith.constant 0 : index
    %c0_6 = arith.constant 0 : index
    %3 = vector.load %arg3[%c0_5, %c0_6] : memref<160x64xbf16, #tpu.memory_space<vmem>>, vector<160x64xbf16>
    %c0_7 = arith.constant 0 : index
    %c0_8 = arith.constant 0 : index
    %4 = vector.load %arg4[%c0_7, %c0_8] : memref<4x224xf32, #tpu.memory_space<vmem>>, vector<4x224xf32>
    %5 = arith.truncf %0 : vector<8x176xf32> to vector<8x176xbf16>
    %cst = arith.constant dense<0.000000e+00> : vector<8x224xf32>
    %6 = tpu.matmul %5, %1, %cst {dimension_numbers = #tpu.dot_dimension_numbers<[1], [0], [0], [1], [0, 0, 1, 1], [], []>} : vector<8x176xbf16>, vector<176x224xbf16>, vector<8x224xf32> -> vector<8x224xf32>
    %7 = vector.extract_strided_slice %4 {offsets = [0, 0], sizes = [1, 224], strides = [1, 1]} : vector<4x224xf32> to vector<1x224xf32>
    %8 = vector.broadcast %7 : vector<1x224xf32> to vector<8x224xf32>
    %9 = arith.addf %6, %8 : vector<8x224xf32>
    %10 = vector.extract_strided_slice %9 {offsets = [0, 160], sizes = [8, 64], strides = [1, 1]} : vector<8x224xf32> to vector<8x64xf32>
    %11 = vector.extract_strided_slice %2 {offsets = [0, 0], sizes = [32, 32], strides = [1, 1]} : vector<96x32xbf16> to vector<32x32xbf16>
    %12 = vector.extract_strided_slice %2 {offsets = [32, 0], sizes = [32, 32], strides = [1, 1]} : vector<96x32xbf16> to vector<32x32xbf16>
    %13 = vector.extract_strided_slice %2 {offsets = [32, 0], sizes = [64, 32], strides = [1, 1]} : vector<96x32xbf16> to vector<64x32xbf16>
    %14 = vector.extract_strided_slice %4 {offsets = [1, 0], sizes = [1, 32], strides = [1, 1]} : vector<4x224xf32> to vector<1x32xf32>
    %15 = vector.shape_cast %14 : vector<1x32xf32> to vector<1x32xf32>
    %16 = vector.broadcast %15 : vector<1x32xf32> to vector<8x32xf32>
    %17 = vector.extract_strided_slice %9 {offsets = [0, 128], sizes = [8, 32], strides = [1, 1]} : vector<8x224xf32> to vector<8x32xf32>
    %18 = math.tanh %17 : vector<8x32xf32>
    %19 = arith.truncf %18 : vector<8x32xf32> to vector<8x32xbf16>
    %cst_9 = arith.constant dense<0.000000e+00> : vector<8x32xf32>
    %20 = tpu.matmul %19, %12, %cst_9 {dimension_numbers = #tpu.dot_dimension_numbers<[1], [0], [0], [1], [0, 0, 1, 1], [], []>} : vector<8x32xbf16>, vector<32x32xbf16>, vector<8x32xf32> -> vector<8x32xf32>
    %21 = arith.addf %20, %16 : vector<8x32xf32>
    %22 = math.tanh %21 : vector<8x32xf32>
    %23 = vector.extract_strided_slice %9 {offsets = [0, 96], sizes = [8, 32], strides = [1, 1]} : vector<8x224xf32> to vector<8x32xf32>
    %24 = arith.truncf %18 : vector<8x32xf32> to vector<8x32xbf16>
    %cst_10 = arith.constant dense<0.000000e+00> : vector<8x32xf32>
    %25 = tpu.matmul %24, %11, %cst_10 {dimension_numbers = #tpu.dot_dimension_numbers<[1], [0], [0], [1], [0, 0, 1, 1], [], []>} : vector<8x32xbf16>, vector<32x32xbf16>, vector<8x32xf32> -> vector<8x32xf32>
    %26 = arith.addf %23, %25 : vector<8x32xf32>
    %27 = math.tanh %26 : vector<8x32xf32>
    %28 = tpu.concatenate %27, %22 in 1 : vector<8x32xf32>, vector<8x32xf32> -> vector<8x64xf32>
    %29 = arith.truncf %28 : vector<8x64xf32> to vector<8x64xbf16>
    %cst_11 = arith.constant dense<0.000000e+00> : vector<8x32xf32>
    %30 = tpu.matmul %29, %13, %cst_11 {dimension_numbers = #tpu.dot_dimension_numbers<[1], [0], [0], [1], [0, 0, 1, 1], [], []>} : vector<8x64xbf16>, vector<64x32xbf16>, vector<8x32xf32> -> vector<8x32xf32>
    %31 = arith.addf %30, %16 : vector<8x32xf32>
    %32 = math.tanh %31 : vector<8x32xf32>
    %33 = vector.extract_strided_slice %9 {offsets = [0, 64], sizes = [8, 32], strides = [1, 1]} : vector<8x224xf32> to vector<8x32xf32>
    %34 = arith.truncf %27 : vector<8x32xf32> to vector<8x32xbf16>
    %cst_12 = arith.constant dense<0.000000e+00> : vector<8x32xf32>
    %35 = tpu.matmul %34, %11, %cst_12 {dimension_numbers = #tpu.dot_dimension_numbers<[1], [0], [0], [1], [0, 0, 1, 1], [], []>} : vector<8x32xbf16>, vector<32x32xbf16>, vector<8x32xf32> -> vector<8x32xf32>
    %36 = arith.addf %33, %35 : vector<8x32xf32>
    %37 = math.tanh %36 : vector<8x32xf32>
    %38 = tpu.concatenate %37, %32 in 1 : vector<8x32xf32>, vector<8x32xf32> -> vector<8x64xf32>
    %39 = arith.truncf %38 : vector<8x64xf32> to vector<8x64xbf16>
    %cst_13 = arith.constant dense<0.000000e+00> : vector<8x32xf32>
    %40 = tpu.matmul %39, %13, %cst_13 {dimension_numbers = #tpu.dot_dimension_numbers<[1], [0], [0], [1], [0, 0, 1, 1], [], []>} : vector<8x64xbf16>, vector<64x32xbf16>, vector<8x32xf32> -> vector<8x32xf32>
    %41 = arith.addf %40, %16 : vector<8x32xf32>
    %42 = math.tanh %41 : vector<8x32xf32>
    %43 = vector.extract_strided_slice %9 {offsets = [0, 32], sizes = [8, 32], strides = [1, 1]} : vector<8x224xf32> to vector<8x32xf32>
    %44 = arith.truncf %37 : vector<8x32xf32> to vector<8x32xbf16>
    %cst_14 = arith.constant dense<0.000000e+00> : vector<8x32xf32>
    %45 = tpu.matmul %44, %11, %cst_14 {dimension_numbers = #tpu.dot_dimension_numbers<[1], [0], [0], [1], [0, 0, 1, 1], [], []>} : vector<8x32xbf16>, vector<32x32xbf16>, vector<8x32xf32> -> vector<8x32xf32>
    %46 = arith.addf %43, %45 : vector<8x32xf32>
    %47 = math.tanh %46 : vector<8x32xf32>
    %48 = tpu.concatenate %47, %42 in 1 : vector<8x32xf32>, vector<8x32xf32> -> vector<8x64xf32>
    %49 = arith.truncf %48 : vector<8x64xf32> to vector<8x64xbf16>
    %cst_15 = arith.constant dense<0.000000e+00> : vector<8x32xf32>
    %50 = tpu.matmul %49, %13, %cst_15 {dimension_numbers = #tpu.dot_dimension_numbers<[1], [0], [0], [1], [0, 0, 1, 1], [], []>} : vector<8x64xbf16>, vector<64x32xbf16>, vector<8x32xf32> -> vector<8x32xf32>
    %51 = arith.addf %50, %16 : vector<8x32xf32>
    %52 = math.tanh %51 : vector<8x32xf32>
    %53 = vector.extract_strided_slice %9 {offsets = [0, 0], sizes = [8, 32], strides = [1, 1]} : vector<8x224xf32> to vector<8x32xf32>
    %54 = arith.truncf %47 : vector<8x32xf32> to vector<8x32xbf16>
    %cst_16 = arith.constant dense<0.000000e+00> : vector<8x32xf32>
    %55 = tpu.matmul %54, %11, %cst_16 {dimension_numbers = #tpu.dot_dimension_numbers<[1], [0], [0], [1], [0, 0, 1, 1], [], []>} : vector<8x32xbf16>, vector<32x32xbf16>, vector<8x32xf32> -> vector<8x32xf32>
    %56 = arith.addf %53, %55 : vector<8x32xf32>
    %57 = math.tanh %56 : vector<8x32xf32>
    %58 = tpu.concatenate %57, %52 in 1 : vector<8x32xf32>, vector<8x32xf32> -> vector<8x64xf32>
    %59 = arith.truncf %58 : vector<8x64xf32> to vector<8x64xbf16>
    %cst_17 = arith.constant dense<0.000000e+00> : vector<8x32xf32>
    %60 = tpu.matmul %59, %13, %cst_17 {dimension_numbers = #tpu.dot_dimension_numbers<[1], [0], [0], [1], [0, 0, 1, 1], [], []>} : vector<8x64xbf16>, vector<64x32xbf16>, vector<8x32xf32> -> vector<8x32xf32>
    %61 = arith.addf %60, %16 : vector<8x32xf32>
    %62 = math.tanh %61 : vector<8x32xf32>
    %63 = vector.extract_strided_slice %3 {offsets = [0, 0], sizes = [32, 64], strides = [1, 1]} : vector<160x64xbf16> to vector<32x64xbf16>
    %64 = vector.extract_strided_slice %3 {offsets = [32, 0], sizes = [64, 64], strides = [1, 1]} : vector<160x64xbf16> to vector<64x64xbf16>
    %65 = vector.extract_strided_slice %3 {offsets = [96, 0], sizes = [64, 64], strides = [1, 1]} : vector<160x64xbf16> to vector<64x64xbf16>
    %66 = arith.truncf %62 : vector<8x32xf32> to vector<8x32xbf16>
    %cst_18 = arith.constant dense<0.000000e+00> : vector<8x64xf32>
    %67 = tpu.matmul %66, %63, %cst_18 {dimension_numbers = #tpu.dot_dimension_numbers<[1], [0], [0], [1], [0, 0, 1, 1], [], []>} : vector<8x32xbf16>, vector<32x64xbf16>, vector<8x64xf32> -> vector<8x64xf32>
    %68 = arith.addf %67, %10 : vector<8x64xf32>
    %cst_19 = arith.constant 0.000000e+00 : f32
    %69 = vector.broadcast %cst_19 : f32 to vector<8x64xf32>
    %70 = arith.maximumf %68, %69 : vector<8x64xf32>
    %71 = arith.truncf %70 : vector<8x64xf32> to vector<8x64xbf16>
    %cst_20 = arith.constant dense<0.000000e+00> : vector<8x64xf32>
    %72 = tpu.matmul %71, %64, %cst_20 {dimension_numbers = #tpu.dot_dimension_numbers<[1], [0], [0], [1], [0, 0, 1, 1], [], []>} : vector<8x64xbf16>, vector<64x64xbf16>, vector<8x64xf32> -> vector<8x64xf32>
    %73 = vector.extract_strided_slice %4 {offsets = [2, 0], sizes = [1, 64], strides = [1, 1]} : vector<4x224xf32> to vector<1x64xf32>
    %74 = vector.broadcast %73 : vector<1x64xf32> to vector<8x64xf32>
    %75 = arith.addf %72, %74 : vector<8x64xf32>
    %cst_21 = arith.constant 0.000000e+00 : f32
    %76 = vector.broadcast %cst_21 : f32 to vector<8x64xf32>
    %77 = arith.maximumf %75, %76 : vector<8x64xf32>
    %78 = arith.truncf %77 : vector<8x64xf32> to vector<8x64xbf16>
    %cst_22 = arith.constant dense<0.000000e+00> : vector<8x64xf32>
    %79 = tpu.matmul %78, %65, %cst_22 {dimension_numbers = #tpu.dot_dimension_numbers<[1], [0], [0], [1], [0, 0, 1, 1], [], []>} : vector<8x64xbf16>, vector<64x64xbf16>, vector<8x64xf32> -> vector<8x64xf32>
    %80 = vector.extract_strided_slice %79 {offsets = [0, 0], sizes = [8, 16], strides = [1, 1]} : vector<8x64xf32> to vector<8x16xf32>
    %81 = vector.extract_strided_slice %4 {offsets = [3, 0], sizes = [1, 16], strides = [1, 1]} : vector<4x224xf32> to vector<1x16xf32>
    %82 = vector.broadcast %81 : vector<1x16xf32> to vector<8x16xf32>
    %83 = arith.addf %80, %82 : vector<8x16xf32>
    %84 = vector.extract_strided_slice %83 {offsets = [0, 0], sizes = [8, 8], strides = [1, 1]} : vector<8x16xf32> to vector<8x8xf32>
    %85 = vector.extract_strided_slice %83 {offsets = [0, 8], sizes = [8, 8], strides = [1, 1]} : vector<8x16xf32> to vector<8x8xf32>
    %86 = math.tanh %85 : vector<8x8xf32>
    %cst_23 = arith.constant 1.000000e+00 : f32
    %87 = vector.broadcast %cst_23 : f32 to vector<8x8xf32>
    %88 = arith.addf %86, %87 : vector<8x8xf32>
    %cst_24 = arith.constant 3.000000e+00 : f32
    %89 = vector.broadcast %cst_24 : f32 to vector<8x8xf32>
    %90 = arith.mulf %89, %88 : vector<8x8xf32>
    %cst_25 = arith.constant -4.000000e+00 : f32
    %91 = vector.broadcast %cst_25 : f32 to vector<8x8xf32>
    %92 = arith.addf %91, %90 : vector<8x8xf32>
    %93 = math.exp %92 : vector<8x8xf32>
    %94 = tpu.concatenate %84, %93 in 1 : vector<8x8xf32>, vector<8x8xf32> -> vector<8x16xf32>
    %c0_26 = arith.constant 0 : index
    %c0_27 = arith.constant 0 : index
    %95 = vector.load %arg5[%c0_26, %c0_27] : memref<8x16xf32, #tpu.memory_space<vmem>>, vector<8x16xf32>
    tpu.vector_store %arg5[%c0_26, %c0_27], %94 {strides = array<i32>} : memref<8x16xf32, #tpu.memory_space<vmem>>, vector<8x16xf32>,
    return
  }
}

</mosaic_0001>

<llo_original>
// kernel: actor_forward.1
$region0: #{actor_forward.1}
  #allocation0 [shape = 'u32[]', space=smem, size = 0x4, offset = 0x4, fixed_abs, tag = 'smem constant byte address 0x4 - core index']
  #allocation1 [shape = 'u32[144,128]{1,0:T(1,128)}', space=vmem, size = 0x12000, scoped, tag = 'internal scratch']
  %s0 = inlined_call_operand.vmem [shape: f32[8,176], index: 0, kind: input, shape index: {}]
  %s1 = inlined_call_operand.vmem [shape: bf16[176,224], index: 1, kind: input, shape index: {}]
  %s2 = inlined_call_operand.vmem [shape: bf16[96,32], index: 2, kind: input, shape index: {}]
  %s3 = inlined_call_operand.vmem [shape: bf16[160,64], index: 3, kind: input, shape index: {}]
  %s4 = inlined_call_operand.vmem [shape: f32[4,224], index: 4, kind: input, shape index: {}]
  %s5 = inlined_call_operand.vmem [shape: f32[8,16], index: 5, kind: output, shape index: {}]
  %s6 = sld [smem:[#allocation0]]
  $region30: #{actor_forward.1} parent=0
    _
  %s8 = ssub.s32 1, %s6
  %s9 = scalar_select 0, %s8, %s6
  // Predicated region
  $region2: #{actor_forward.1} parent=0 // pred_check
    _
  $region3: #{actor_forward.1} parent=0 // pred_check_branch
    %11 = sbr.rel (0) target = $region5
  $region4: #{actor_forward.1} parent=0 // pred_region
    _
  $region5: #{actor_forward.1} parent=0 // pred_fallthru
    _
  // Predicated region
  $region6: #{actor_forward.1} parent=0 // pred_check
    _
  $region7: #{actor_forward.1} parent=0 // pred_check_branch
    %13 = sbr.rel (0) target = $region9
  $region8: #{actor_forward.1} parent=0 // pred_region
    _
  $region9: #{actor_forward.1} parent=0 // pred_fallthru
    _
  // Predicated region
  $region10: #{actor_forward.1} parent=0 // pred_check
    _
  $region11: #{actor_forward.1} parent=0 // pred_check_branch
    %15 = sbr.rel (0) target = $region13
  $region12: #{actor_forward.1} parent=0 // pred_region
    _
  $region13: #{actor_forward.1} parent=0 // pred_fallthru
    _
  // Predicated region
  $region14: #{actor_forward.1} parent=0 // pred_check
    _
  $region15: #{actor_forward.1} parent=0 // pred_check_branch
    %17 = sbr.rel (0) target = $region17
  $region16: #{actor_forward.1} parent=0 // pred_region
    _
  $region17: #{actor_forward.1} parent=0 // pred_fallthru
    _
  // Predicated region
  $region18: #{actor_forward.1} parent=0 // pred_check
    _
  $region19: #{actor_forward.1} parent=0 // pred_check_branch
    %19 = sbr.rel (0) target = $region21
  $region20: #{actor_forward.1} parent=0 // pred_region
    _
  $region21: #{actor_forward.1} parent=0 // pred_fallthru
    _
  %v21 = vld [vmem:[%s0] sm:$0xff]
  %v22 = vld [vmem:[%s0 + $0x8] sm:$0xff]
  %v23 = vld [vmem:[%s1] sm:$0xff]
  %v24 = vld [vmem:[%s1 + $0x8] sm:$0xff]
  %v25 = vld [vmem:[%s1 + $0x10] sm:$0xff]
  %v26 = vld [vmem:[%s1 + $0x18] sm:$0xff]
  %v27 = vld [vmem:[%s1 + $0x20] sm:$0xff]
  %v28 = vld [vmem:[%s1 + $0x28] sm:$0xff]
  %v29 = vld [vmem:[%s1 + $0x30] sm:$0xff]
  %v30 = vld [vmem:[%s1 + $0x38] sm:$0xff]
  %v31 = vld [vmem:[%s1 + $0x40] sm:$0xff]
  %v32 = vld [vmem:[%s1 + $0x48] sm:$0xff]
  %v33 = vld [vmem:[%s1 + $0x50] sm:$0xff]
  %v34 = vld [vmem:[%s1 + $0x58] sm:$0xff]
  %v35 = vld [vmem:[%s1 + $0x60] sm:$0xff]
  %v36 = vld [vmem:[%s1 + $0x68] sm:$0xff]
  %v37 = vld [vmem:[%s1 + $0x70] sm:$0xff]
  %v38 = vld [vmem:[%s1 + $0x78] sm:$0xff]
  %v39 = vld [vmem:[%s1 + $0x80] sm:$0xff]
  %v40 = vld [vmem:[%s1 + $0x88] sm:$0xff]
  %v41 = vld [vmem:[%s1 + $0x90] sm:$0xff]
  %v42 = vld [vmem:[%s1 + $0x98] sm:$0xff]
  %v43 = vld [vmem:[%s1 + $0xa0] sm:$0xff]
  %v44 = vld [vmem:[%s1 + $0xa8] sm:$0xff]
  %v45 = vld [vmem:[%s2] sm:$0xf]
  %v46 = vld [vmem:[%s2 + $0x4] sm:$0xf]
  %v47 = vld [vmem:[%s2 + $0x8] sm:$0xf]
  %v48 = vld [vmem:[%s2 + $0xc] sm:$0xf]
  %v49 = vld [vmem:[%s2 + $0x10] sm:$0xf]
  %v50 = vld [vmem:[%s2 + $0x14] sm:$0xf]
  %v51 = vld [vmem:[%s2 + $0x18] sm:$0xf]
  %v52 = vld [vmem:[%s2 + $0x1c] sm:$0xf]
  %v53 = vld [vmem:[%s2 + $0x20] sm:$0xf]
  %v54 = vld [vmem:[%s2 + $0x24] sm:$0xf]
  %v55 = vld [vmem:[%s2 + $0x28] sm:$0xf]
  %v56 = vld [vmem:[%s2 + $0x2c] sm:$0xf]
  %v57 = vld [vmem:[%s3] sm:$0xf]
  %v58 = vld [vmem:[%s3 + $0x4] sm:$0xf]
  %v59 = vld [vmem:[%s3 + $0x8] sm:$0xf]
  %v60 = vld [vmem:[%s3 + $0xc] sm:$0xf]
  %v61 = vld [vmem:[%s3 + $0x10] sm:$0xf]
  %v62 = vld [vmem:[%s3 + $0x14] sm:$0xf]
  %v63 = vld [vmem:[%s3 + $0x18] sm:$0xf]
  %v64 = vld [vmem:[%s3 + $0x1c] sm:$0xf]
  %v65 = vld [vmem:[%s3 + $0x20] sm:$0xf]
  %v66 = vld [vmem:[%s3 + $0x24] sm:$0xf]
  %v67 = vld [vmem:[%s3 + $0x28] sm:$0xf]
  %v68 = vld [vmem:[%s3 + $0x2c] sm:$0xf]
  %v69 = vld [vmem:[%s3 + $0x30] sm:$0xf]
  %v70 = vld [vmem:[%s3 + $0x34] sm:$0xf]
  %v71 = vld [vmem:[%s3 + $0x38] sm:$0xf]
  %v72 = vld [vmem:[%s3 + $0x3c] sm:$0xf]
  %v73 = vld [vmem:[%s3 + $0x40] sm:$0xf]
  %v74 = vld [vmem:[%s3 + $0x44] sm:$0xf]
  %v75 = vld [vmem:[%s3 + $0x48] sm:$0xf]
  %v76 = vld [vmem:[%s3 + $0x4c] sm:$0xf]
  %v77 = vld [vmem:[%s4] sm:$0xff]
  %v78 = vpack.c.bf16 %v21, %v21
  %v79 = vpack.c.bf16 %v22, %v22
  %v81 = vlaneseq
  %v82 = vshrl.u32 %v81, 7
  %v83 = vsub.s32 0, %v82
  %v84 = vrot.slane %v77, %v83
  %v85 = vlaneseq
  %v86 = vshrl.u32 %v85, 7
  %v87 = vsub.s32 4, %v86
  %v88 = vrot.slane %v77, %v87
  %v91 = vlaneseq
  %v92 = vshrl.u32 %v91, 7
  %v93 = vsub.s32 0, %v92
  %v94 = vrot.slane %v84, %v93
  %v95 = vlaneseq
  %v96 = vshrl.u32 %v95, 7
  %v97 = vsub.s32 0, %v96
  %v98 = vrot.slane %v88, %v97
  %v121 = vunpack.c.l.b16 %v23
  %v122 = vunpack.c.h.b16 %v23
  %v123 = vunpack.c.l.b16 %v24
  %v124 = vunpack.c.h.b16 %v24
  %v125 = vunpack.c.l.b16 %v25
  %v126 = vunpack.c.h.b16 %v25
  %v127 = vunpack.c.l.b16 %v26
  %v128 = vunpack.c.h.b16 %v26
  %v129 = vunpack.c.l.b16 %v27
  %v130 = vunpack.c.h.b16 %v27
  %v131 = vunpack.c.l.b16 %v28
  %v132 = vunpack.c.h.b16 %v28
  %v133 = vunpack.c.l.b16 %v29
  %v134 = vunpack.c.h.b16 %v29
  %v135 = vunpack.c.l.b16 %v30
  %v136 = vunpack.c.h.b16 %v30
  %v137 = vunpack.c.l.b16 %v31
  %v138 = vunpack.c.h.b16 %v31
  %v139 = vunpack.c.l.b16 %v32
  %v140 = vunpack.c.h.b16 %v32
  %v141 = vunpack.c.l.b16 %v33
  %v142 = vunpack.c.h.b16 %v33
  %v143 = vunpack.c.l.b16 %v34
  %v144 = vunpack.c.h.b16 %v34
  %v145 = vunpack.c.l.b16 %v35
  %v146 = vunpack.c.h.b16 %v35
  %v147 = vunpack.c.l.b16 %v36
  %v148 = vunpack.c.h.b16 %v36
  %v149 = vunpack.c.l.b16 %v37
  %v150 = vunpack.c.h.b16 %v37
  %v151 = vunpack.c.l.b16 %v38
  %v152 = vunpack.c.h.b16 %v38
  %v153 = vunpack.c.l.b16 %v39
  %v154 = vunpack.c.h.b16 %v39
  %v155 = vunpack.c.l.b16 %v40
  %v156 = vunpack.c.h.b16 %v40
  %v157 = vunpack.c.l.b16 %v41
  %v158 = vunpack.c.h.b16 %v41
  %v159 = vunpack.c.l.b16 %v42
  %v160 = vunpack.c.h.b16 %v42
  %v161 = vunpack.c.l.b16 %v43
  %v162 = vunpack.c.h.b16 %v43
  %v163 = vunpack.c.l.b16 %v44
  %v164 = vunpack.c.h.b16 %v44
  %v165 = vpack.c.b16 %v123, %v121
  %v166 = vpack.c.b16 %v124, %v122
  %v167 = vpack.c.b16 %v127, %v125
  %v168 = vpack.c.b16 %v128, %v126
  %v169 = vpack.c.b16 %v131, %v129
  %v170 = vpack.c.b16 %v132, %v130
  %v171 = vpack.c.b16 %v135, %v133
  %v172 = vpack.c.b16 %v136, %v134
  %v173 = vpack.c.b16 %v139, %v137
  %v174 = vpack.c.b16 %v140, %v138
  %v175 = vpack.c.b16 %v143, %v141
  %v176 = vpack.c.b16 %v144, %v142
  %v177 = vpack.c.b16 %v147, %v145
  %v178 = vpack.c.b16 %v148, %v146
  %v179 = vpack.c.b16 %v151, %v149
  %v180 = vpack.c.b16 %v152, %v150
  %v181 = vpack.c.b16 %v155, %v153
  %v182 = vpack.c.b16 %v156, %v154
  %v183 = vpack.c.b16 %v159, %v157
  %v184 = vpack.c.b16 %v160, %v158
  %v185 = vpack.c.b16 %v163, %v161
  %v186 = vpack.c.b16 %v164, %v162
  %vm209 = vcmask 392192
  %v211 = vsel %vm209, %v79, 0
  %213 = vmatprep.subr.bf16.mxu0 %v166
  %214 = vmatpush1.bf16.msra.mxu0 %v165
  %215 = vmatprep.subr.bf16.mxu0 %v168
  %216 = vmatpush1.bf16.msra.mxu0 %v167
  %217 = vmatprep.subr.bf16.mxu0 %v170
  %218 = vmatpush1.bf16.msra.mxu0 %v169
  %219 = vmatprep.subr.bf16.mxu0 %v172
  %220 = vmatpush1.bf16.msra.mxu0 %v171
  %221 = vmatprep.subr.bf16.mxu0 %v174
  %222 = vmatpush1.bf16.msra.mxu0 %v173
  %223 = vmatprep.subr.bf16.mxu0 %v176
  %224 = vmatpush1.bf16.msra.mxu0 %v175
  %225 = vmatprep.subr.bf16.mxu0 %v178
  %226 = vmatpush1.bf16.msra.mxu0 %v177
  %227 = vmatprep.subr.bf16.mxu0 %v180
  %228 = vmatpush1.bf16.msra.mxu0 %v179
  %229 = vmatprep.subr.bf16.mxu0 %v182
  %230 = vmatpush1.bf16.msra.mxu0 %v181
  %231 = vmatprep.subr.bf16.mxu0 %v184
  %232 = vmatpush1.bf16.msra.mxu0 %v183
  %233 = vmatprep.subr.bf16.mxu0 %v186
  %234 = vmatpush1.bf16.msra.mxu0 %v185
  %235 = vmatprep.subr.bf16.mxu0 0
  %236 = vmatpush1.bf16.msra.mxu0 0
  %237 = vmatprep.subr.bf16.mxu0 0
  %238 = vmatpush1.bf16.msra.mxu0 0
  %239 = vmatprep.subr.bf16.mxu0 0
  %240 = vmatpush1.bf16.msra.mxu0 0
  %241 = vmatprep.subr.bf16.mxu0 0
  %242 = vmatpush1.bf16.msra.mxu0 0
  %243 = vmatprep.subr.bf16.mxu0 0
  %244 = vmatpush1.bf16.msra.mxu0 0
  %245 = vmatprep.mubr.bf16.mxu0 %v211
  %246 = vmatmul.mubr.bf16.gmra.mrb[0].mxu0 %v78
  %v247 = vpop.f32.mrb[0].mxu0
  %v248 = vadd.f32 %v94, %v247
  %v249 = vpop.f32.mrb[0].mxu0
  %v250 = vadd.f32 %v98, %v249
  %v251 = vpop.f32.mrb[0].mxu0
  %v252 = vpop.f32.mrb[0].mxu0
  %253 = vdwg.mxu0
  %v254 = vlaneseq
  %v255 = vshrl.u32 %v254, 7
  %v256 = vsub.s32 1, %v255
  %v257 = vrot.slane %v77, %v256
  %v258 = vtanh.pop %v250
  %v259 = vpack.c.bf16 %v258, %v258
  %v264 = vunpack.c.l.b16 %v49
  %v265 = vunpack.c.l.b16 %v50
  %v266 = vunpack.c.l.b16 %v51
  %v267 = vunpack.c.l.b16 %v52
  %v268 = vpack.c.b16 %v265, %v264
  %v269 = vpack.c.b16 %v267, %v266
  %vm272 = vcmask 261120
  %v274 = vsel %vm272, %v259, 0
  %276 = vmatprep.subr.bf16.mxu0 0
  %277 = vmatpush1.bf16.msra.mxu0 %v268
  %278 = vmatprep.subr.bf16.mxu0 0
  %279 = vmatpush1.bf16.msra.mxu0 %v269
  %280 = vmatprep.subr.bf16.mxu0 0
  %281 = vmatpush1.bf16.msra.mxu0 0
  %282 = vmatprep.subr.bf16.mxu0 0
  %283 = vmatpush1.bf16.msra.mxu0 0
  %284 = vmatprep.subr.bf16.mxu0 0
  %285 = vmatpush1.bf16.msra.mxu0 0
  %286 = vmatprep.subr.bf16.mxu0 0
  %287 = vmatpush1.bf16.msra.mxu0 0
  %288 = vmatprep.subr.bf16.mxu0 0
  %289 = vmatpush1.bf16.msra.mxu0 0
  %290 = vmatprep.subr.bf16.mxu0 0
  %291 = vmatpush1.bf16.msra.mxu0 0
  %292 = vmatprep.subr.bf16.mxu0 0
  %293 = vmatpush1.bf16.msra.mxu0 0
  %294 = vmatprep.subr.bf16.mxu0 0
  %295 = vmatpush1.bf16.msra.mxu0 0
  %296 = vmatprep.subr.bf16.mxu0 0
  %297 = vmatpush1.bf16.msra.mxu0 0
  %298 = vmatprep.subr.bf16.mxu0 0
  %299 = vmatpush1.bf16.msra.mxu0 0
  %300 = vmatprep.subr.bf16.mxu0 0
  %301 = vmatpush1.bf16.msra.mxu0 0
  %302 = vmatprep.subr.bf16.mxu0 0
  %303 = vmatpush1.bf16.msra.mxu0 0
  %304 = vmatprep.subr.bf16.mxu0 0
  %305 = vmatpush1.bf16.msra.mxu0 0
  %306 = vmatprep.subr.bf16.mxu0 0
  %307 = vmatpush1.bf16.msra.mxu0 0
  %308 = vmatprep.mubr.bf16.mxu0 0
  %309 = vmatmul.mubr.bf16.gmra.mrb[0].mxu0 %v274
  %v310 = vpop.f32.mrb[0].mxu0
  %v311 = vadd.f32 %v257, %v310
  %v312 = vpop.f32.mrb[0].mxu0
  %v313 = vpop.f32.mrb[0].mxu0
  %v314 = vpop.f32.mrb[0].mxu0
  %315 = vdwg.mxu0
  %v316 = vtanh.pop %v311
  %v321 = vunpack.c.l.b16 %v45
  %v322 = vunpack.c.l.b16 %v46
  %v323 = vunpack.c.l.b16 %v47
  %v324 = vunpack.c.l.b16 %v48
  %v325 = vpack.c.b16 %v322, %v321
  %v326 = vpack.c.b16 %v324, %v323
  %329 = vmatprep.subr.bf16.mxu0 0
  %330 = vmatpush1.bf16.msra.mxu0 %v325
  %331 = vmatprep.subr.bf16.mxu0 0
  %332 = vmatpush1.bf16.msra.mxu0 %v326
  %333 = vmatprep.subr.bf16.mxu0 0
  %334 = vmatpush1.bf16.msra.mxu0 0
  %335 = vmatprep.subr.bf16.mxu0 0
  %336 = vmatpush1.bf16.msra.mxu0 0
  %337 = vmatprep.subr.bf16.mxu0 0
  %338 = vmatpush1.bf16.msra.mxu0 0
  %339 = vmatprep.subr.bf16.mxu0 0
  %340 = vmatpush1.bf16.msra.mxu0 0
  %341 = vmatprep.subr.bf16.mxu0 0
  %342 = vmatpush1.bf16.msra.mxu0 0
  %343 = vmatprep.subr.bf16.mxu0 0
  %344 = vmatpush1.bf16.msra.mxu0 0
  %345 = vmatprep.subr.bf16.mxu0 0
  %346 = vmatpush1.bf16.msra.mxu0 0
  %347 = vmatprep.subr.bf16.mxu0 0
  %348 = vmatpush1.bf16.msra.mxu0 0
  %349 = vmatprep.subr.bf16.mxu0 0
  %350 = vmatpush1.bf16.msra.mxu0 0
  %351 = vmatprep.subr.bf16.mxu0 0
  %352 = vmatpush1.bf16.msra.mxu0 0
  %353 = vmatprep.subr.bf16.mxu0 0
  %354 = vmatpush1.bf16.msra.mxu0 0
  %355 = vmatprep.subr.bf16.mxu0 0
  %356 = vmatpush1.bf16.msra.mxu0 0
  %357 = vmatprep.subr.bf16.mxu0 0
  %358 = vmatpush1.bf16.msra.mxu0 0
  %359 = vmatprep.subr.bf16.mxu0 0
  %360 = vmatpush1.bf16.msra.mxu0 0
  %361 = vmatprep.mubr.bf16.mxu0 0
  %362 = vmatmul.mubr.bf16.gmra.mrb[0].mxu0 %v274
  %v363 = vpop.f32.mrb[0].mxu0
  %v364 = vadd.f32 0.0, %v363
  %v365 = vpop.f32.mrb[0].mxu0
  %v366 = vpop.f32.mrb[0].mxu0
  %v367 = vpop.f32.mrb[0].mxu0
  %368 = vdwg.mxu0
  %370 = vrot.lane.b32.xlu0 %v364, 96
  %v371 = vpop.permute.xlu0 %370
  %v373 = vadd.f32 %v248, %v371
  %v374 = vtanh.pop %v373
  %376 = vrot.lane.b32.xlu0 %v374, 32
  %v377 = vpop.permute.xlu0 %376
  %380 = vrot.lane.b32.xlu0 %v316, 32
  %v381 = vpop.permute.xlu0 %380
  %v383 = vsel %vm272, %v377, %v381
  %v384 = vpack.c.bf16 %v383, %v383
  %v389 = vunpack.c.l.b16 %v53
  %v390 = vunpack.c.l.b16 %v54
  %v391 = vunpack.c.l.b16 %v55
  %v392 = vunpack.c.l.b16 %v56
  %v393 = vpack.c.b16 %v390, %v389
  %v394 = vpack.c.b16 %v392, %v391
  %vm397 = vcmask 523264
  %v399 = vsel %vm397, %v384, 0
  %401 = vmatprep.subr.bf16.mxu0 0
  %402 = vmatpush1.bf16.msra.mxu0 %v268
  %403 = vmatprep.subr.bf16.mxu0 0
  %404 = vmatpush1.bf16.msra.mxu0 %v269
  %405 = vmatprep.subr.bf16.mxu0 0
  %406 = vmatpush1.bf16.msra.mxu0 %v393
  %407 = vmatprep.subr.bf16.mxu0 0
  %408 = vmatpush1.bf16.msra.mxu0 %v394
  %409 = vmatprep.subr.bf16.mxu0 0
  %410 = vmatpush1.bf16.msra.mxu0 0
  %411 = vmatprep.subr.bf16.mxu0 0
  %412 = vmatpush1.bf16.msra.mxu0 0
  %413 = vmatprep.subr.bf16.mxu0 0
  %414 = vmatpush1.bf16.msra.mxu0 0
  %415 = vmatprep.subr.bf16.mxu0 0
  %416 = vmatpush1.bf16.msra.mxu0 0
  %417 = vmatprep.subr.bf16.mxu0 0
  %418 = vmatpush1.bf16.msra.mxu0 0
  %419 = vmatprep.subr.bf16.mxu0 0
  %420 = vmatpush1.bf16.msra.mxu0 0
  %421 = vmatprep.subr.bf16.mxu0 0
  %422 = vmatpush1.bf16.msra.mxu0 0
  %423 = vmatprep.subr.bf16.mxu0 0
  %424 = vmatpush1.bf16.msra.mxu0 0
  %425 = vmatprep.subr.bf16.mxu0 0
  %426 = vmatpush1.bf16.msra.mxu0 0
  %427 = vmatprep.subr.bf16.mxu0 0
  %428 = vmatpush1.bf16.msra.mxu0 0
  %429 = vmatprep.subr.bf16.mxu0 0
  %430 = vmatpush1.bf16.msra.mxu0 0
  %431 = vmatprep.subr.bf16.mxu0 0
  %432 = vmatpush1.bf16.msra.mxu0 0
  %433 = vmatprep.mubr.bf16.mxu0 0
  %434 = vmatmul.mubr.bf16.gmra.mrb[0].mxu0 %v399
  %v435 = vpop.f32.mrb[0].mxu0
  %v436 = vadd.f32 %v257, %v435
  %v437 = vpop.f32.mrb[0].mxu0
  %v438 = vpop.f32.mrb[0].mxu0
  %v439 = vpop.f32.mrb[0].mxu0
  %440 = vdwg.mxu0
  %v441 = vtanh.pop %v436
  %v442 = vpack.c.bf16 %v374, %v374
  %444 = vrot.lane.b32.xlu0 %v442, 32
  %v445 = vpop.permute.xlu0 %444
  %v447 = vsel %vm272, %v445, 0
  %449 = vmatprep.subr.bf16.mxu0 0
  %450 = vmatpush1.bf16.msra.mxu0 %v325
  %451 = vmatprep.subr.bf16.mxu0 0
  %452 = vmatpush1.bf16.msra.mxu0 %v326
  %453 = vmatprep.subr.bf16.mxu0 0
  %454 = vmatpush1.bf16.msra.mxu0 0
  %455 = vmatprep.subr.bf16.mxu0 0
  %456 = vmatpush1.bf16.msra.mxu0 0
  %457 = vmatprep.subr.bf16.mxu0 0
  %458 = vmatpush1.bf16.msra.mxu0 0
  %459 = vmatprep.subr.bf16.mxu0 0
  %460 = vmatpush1.bf16.msra.mxu0 0
  %461 = vmatprep.subr.bf16.mxu0 0
  %462 = vmatpush1.bf16.msra.mxu0 0
  %463 = vmatprep.subr.bf16.mxu0 0
  %464 = vmatpush1.bf16.msra.mxu0 0
  %465 = vmatprep.subr.bf16.mxu0 0
  %466 = vmatpush1.bf16.msra.mxu0 0
  %467 = vmatprep.subr.bf16.mxu0 0
  %468 = vmatpush1.bf16.msra.mxu0 0
  %469 = vmatprep.subr.bf16.mxu0 0
  %470 = vmatpush1.bf16.msra.mxu0 0
  %471 = vmatprep.subr.bf16.mxu0 0
  %472 = vmatpush1.bf16.msra.mxu0 0
  %473 = vmatprep.subr.bf16.mxu0 0
  %474 = vmatpush1.bf16.msra.mxu0 0
  %475 = vmatprep.subr.bf16.mxu0 0
  %476 = vmatpush1.bf16.msra.mxu0 0
  %477 = vmatprep.subr.bf16.mxu0 0
  %478 = vmatpush1.bf16.msra.mxu0 0
  %479 = vmatprep.subr.bf16.mxu0 0
  %480 = vmatpush1.bf16.msra.mxu0 0
  %481 = vmatprep.mubr.bf16.mxu0 0
  %482 = vmatmul.mubr.bf16.gmra.mrb[0].mxu0 %v447
  %v483 = vpop.f32.mrb[0].mxu0
  %v484 = vadd.f32 0.0, %v483
  %v485 = vpop.f32.mrb[0].mxu0
  %v486 = vpop.f32.mrb[0].mxu0
  %v487 = vpop.f32.mrb[0].mxu0
  %488 = vdwg.mxu0
  %490 = vrot.lane.b32.xlu0 %v484, 64
  %v491 = vpop.permute.xlu0 %490
  %v493 = vadd.f32 %v248, %v491
  %v494 = vtanh.pop %v493
  %496 = vrot.lane.b32.xlu0 %v494, 64
  %v497 = vpop.permute.xlu0 %496
  %500 = vrot.lane.b32.xlu0 %v441, 32
  %v501 = vpop.permute.xlu0 %500
  %v503 = vsel %vm272, %v497, %v501
  %v504 = vpack.c.bf16 %v503, %v503
  %v506 = vsel %vm397, %v504, 0
  %508 = vmatprep.subr.bf16.mxu0 0
  %509 = vmatpush1.bf16.msra.mxu0 %v268
  %510 = vmatprep.subr.bf16.mxu0 0
  %511 = vmatpush1.bf16.msra.mxu0 %v269
  %512 = vmatprep.subr.bf16.mxu0 0
  %513 = vmatpush1.bf16.msra.mxu0 %v393
  %514 = vmatprep.subr.bf16.mxu0 0
  %515 = vmatpush1.bf16.msra.mxu0 %v394
  %516 = vmatprep.subr.bf16.mxu0 0
  %517 = vmatpush1.bf16.msra.mxu0 0
  %518 = vmatprep.subr.bf16.mxu0 0
  %519 = vmatpush1.bf16.msra.mxu0 0
  %520 = vmatprep.subr.bf16.mxu0 0
  %521 = vmatpush1.bf16.msra.mxu0 0
  %522 = vmatprep.subr.bf16.mxu0 0
  %523 = vmatpush1.bf16.msra.mxu0 0
  %524 = vmatprep.subr.bf16.mxu0 0
  %525 = vmatpush1.bf16.msra.mxu0 0
  %526 = vmatprep.subr.bf16.mxu0 0
  %527 = vmatpush1.bf16.msra.mxu0 0
  %528 = vmatprep.subr.bf16.mxu0 0
  %529 = vmatpush1.bf16.msra.mxu0 0
  %530 = vmatprep.subr.bf16.mxu0 0
  %531 = vmatpush1.bf16.msra.mxu0 0
  %532 = vmatprep.subr.bf16.mxu0 0
  %533 = vmatpush1.bf16.msra.mxu0 0
  %534 = vmatprep.subr.bf16.mxu0 0
  %535 = vmatpush1.bf16.msra.mxu0 0
  %536 = vmatprep.subr.bf16.mxu0 0
  %537 = vmatpush1.bf16.msra.mxu0 0
  %538 = vmatprep.subr.bf16.mxu0 0
  %539 = vmatpush1.bf16.msra.mxu0 0
  %540 = vmatprep.mubr.bf16.mxu0 0
  %541 = vmatmul.mubr.bf16.gmra.mrb[0].mxu0 %v506
  %v542 = vpop.f32.mrb[0].mxu0
  %v543 = vadd.f32 %v257, %v542
  %v544 = vpop.f32.mrb[0].mxu0
  %v545 = vpop.f32.mrb[0].mxu0
  %v546 = vpop.f32.mrb[0].mxu0
  %547 = vdwg.mxu0
  %v548 = vtanh.pop %v543
  %v549 = vpack.c.bf16 %v494, %v494
  %551 = vrot.lane.b32.xlu0 %v549, 64
  %v552 = vpop.permute.xlu0 %551
  %v554 = vsel %vm272, %v552, 0
  %556 = vmatprep.subr.bf16.mxu0 0
  %557 = vmatpush1.bf16.msra.mxu0 %v325
  %558 = vmatprep.subr.bf16.mxu0 0
  %559 = vmatpush1.bf16.msra.mxu0 %v326
  %560 = vmatprep.subr.bf16.mxu0 0
  %561 = vmatpush1.bf16.msra.mxu0 0
  %562 = vmatprep.subr.bf16.mxu0 0
  %563 = vmatpush1.bf16.msra.mxu0 0
  %564 = vmatprep.subr.bf16.mxu0 0
  %565 = vmatpush1.bf16.msra.mxu0 0
  %566 = vmatprep.subr.bf16.mxu0 0
  %567 = vmatpush1.bf16.msra.mxu0 0
  %568 = vmatprep.subr.bf16.mxu0 0
  %569 = vmatpush1.bf16.msra.mxu0 0
  %570 = vmatprep.subr.bf16.mxu0 0
  %571 = vmatpush1.bf16.msra.mxu0 0
  %572 = vmatprep.subr.bf16.mxu0 0
  %573 = vmatpush1.bf16.msra.mxu0 0
  %574 = vmatprep.subr.bf16.mxu0 0
  %575 = vmatpush1.bf16.msra.mxu0 0
  %576 = vmatprep.subr.bf16.mxu0 0
  %577 = vmatpush1.bf16.msra.mxu0 0
  %578 = vmatprep.subr.bf16.mxu0 0
  %579 = vmatpush1.bf16.msra.mxu0 0
  %580 = vmatprep.subr.bf16.mxu0 0
  %581 = vmatpush1.bf16.msra.mxu0 0
  %582 = vmatprep.subr.bf16.mxu0 0
  %583 = vmatpush1.bf16.msra.mxu0 0
  %584 = vmatprep.subr.bf16.mxu0 0
  %585 = vmatpush1.bf16.msra.mxu0 0
  %586 = vmatprep.subr.bf16.mxu0 0
  %587 = vmatpush1.bf16.msra.mxu0 0
  %588 = vmatprep.mubr.bf16.mxu0 0
  %589 = vmatmul.mubr.bf16.gmra.mrb[0].mxu0 %v554
  %v590 = vpop.f32.mrb[0].mxu0
  %v591 = vadd.f32 0.0, %v590
  %v592 = vpop.f32.mrb[0].mxu0
  %v593 = vpop.f32.mrb[0].mxu0
  %v594 = vpop.f32.mrb[0].mxu0
  %595 = vdwg.mxu0
  %597 = vrot.lane.b32.xlu0 %v591, 32
  %v598 = vpop.permute.xlu0 %597
  %v600 = vadd.f32 %v248, %v598
  %v601 = vtanh.pop %v600
  %603 = vrot.lane.b32.xlu0 %v601, 96
  %v604 = vpop.permute.xlu0 %603
  %607 = vrot.lane.b32.xlu0 %v548, 32
  %v608 = vpop.permute.xlu0 %607
  %v610 = vsel %vm272, %v604, %v608
  %v611 = vpack.c.bf16 %v610, %v610
  %v613 = vsel %vm397, %v611, 0
  %615 = vmatprep.subr.bf16.mxu0 0
  %616 = vmatpush1.bf16.msra.mxu0 %v268
  %617 = vmatprep.subr.bf16.mxu0 0
  %618 = vmatpush1.bf16.msra.mxu0 %v269
  %619 = vmatprep.subr.bf16.mxu0 0
  %620 = vmatpush1.bf16.msra.mxu0 %v393
  %621 = vmatprep.subr.bf16.mxu0 0
  %622 = vmatpush1.bf16.msra.mxu0 %v394
  %623 = vmatprep.subr.bf16.mxu0 0
  %624 = vmatpush1.bf16.msra.mxu0 0
  %625 = vmatprep.subr.bf16.mxu0 0
  %626 = vmatpush1.bf16.msra.mxu0 0
  %627 = vmatprep.subr.bf16.mxu0 0
  %628 = vmatpush1.bf16.msra.mxu0 0
  %629 = vmatprep.subr.bf16.mxu0 0
  %630 = vmatpush1.bf16.msra.mxu0 0
  %631 = vmatprep.subr.bf16.mxu0 0
  %632 = vmatpush1.bf16.msra.mxu0 0
  %633 = vmatprep.subr.bf16.mxu0 0
  %634 = vmatpush1.bf16.msra.mxu0 0
  %635 = vmatprep.subr.bf16.mxu0 0
  %636 = vmatpush1.bf16.msra.mxu0 0
  %637 = vmatprep.subr.bf16.mxu0 0
  %638 = vmatpush1.bf16.msra.mxu0 0
  %639 = vmatprep.subr.bf16.mxu0 0
  %640 = vmatpush1.bf16.msra.mxu0 0
  %641 = vmatprep.subr.bf16.mxu0 0
  %642 = vmatpush1.bf16.msra.mxu0 0
  %643 = vmatprep.subr.bf16.mxu0 0
  %644 = vmatpush1.bf16.msra.mxu0 0
  %645 = vmatprep.subr.bf16.mxu0 0
  %646 = vmatpush1.bf16.msra.mxu0 0
  %647 = vmatprep.mubr.bf16.mxu0 0
  %648 = vmatmul.mubr.bf16.gmra.mrb[0].mxu0 %v613
  %v649 = vpop.f32.mrb[0].mxu0
  %v650 = vadd.f32 %v257, %v649
  %v651 = vpop.f32.mrb[0].mxu0
  %v652 = vpop.f32.mrb[0].mxu0
  %v653 = vpop.f32.mrb[0].mxu0
  %654 = vdwg.mxu0
  %v655 = vtanh.pop %v650
  %v656 = vpack.c.bf16 %v601, %v601
  %658 = vrot.lane.b32.xlu0 %v656, 96
  %v659 = vpop.permute.xlu0 %658
  %v661 = vsel %vm272, %v659, 0
  %663 = vmatprep.subr.bf16.mxu0 0
  %664 = vmatpush1.bf16.msra.mxu0 %v325
  %665 = vmatprep.subr.bf16.mxu0 0
  %666 = vmatpush1.bf16.msra.mxu0 %v326
  %667 = vmatprep.subr.bf16.mxu0 0
  %668 = vmatpush1.bf16.msra.mxu0 0
  %669 = vmatprep.subr.bf16.mxu0 0
  %670 = vmatpush1.bf16.msra.mxu0 0
  %671 = vmatprep.subr.bf16.mxu0 0
  %672 = vmatpush1.bf16.msra.mxu0 0
  %673 = vmatprep.subr.bf16.mxu0 0
  %674 = vmatpush1.bf16.msra.mxu0 0
  %675 = vmatprep.subr.bf16.mxu0 0
  %676 = vmatpush1.bf16.msra.mxu0 0
  %677 = vmatprep.subr.bf16.mxu0 0
  %678 = vmatpush1.bf16.msra.mxu0 0
  %679 = vmatprep.subr.bf16.mxu0 0
  %680 = vmatpush1.bf16.msra.mxu0 0
  %681 = vmatprep.subr.bf16.mxu0 0
  %682 = vmatpush1.bf16.msra.mxu0 0
  %683 = vmatprep.subr.bf16.mxu0 0
  %684 = vmatpush1.bf16.msra.mxu0 0
  %685 = vmatprep.subr.bf16.mxu0 0
  %686 = vmatpush1.bf16.msra.mxu0 0
  %687 = vmatprep.subr.bf16.mxu0 0
  %688 = vmatpush1.bf16.msra.mxu0 0
  %689 = vmatprep.subr.bf16.mxu0 0
  %690 = vmatpush1.bf16.msra.mxu0 0
  %691 = vmatprep.subr.bf16.mxu0 0
  %692 = vmatpush1.bf16.msra.mxu0 0
  %693 = vmatprep.subr.bf16.mxu0 0
  %694 = vmatpush1.bf16.msra.mxu0 0
  %695 = vmatprep.mubr.bf16.mxu0 0
  %696 = vmatmul.mubr.bf16.gmra.mrb[0].mxu0 %v661
  %v697 = vpop.f32.mrb[0].mxu0
  %v698 = vadd.f32 0.0, %v697
  %v699 = vpop.f32.mrb[0].mxu0
  %v700 = vpop.f32.mrb[0].mxu0
  %v701 = vpop.f32.mrb[0].mxu0
  %702 = vdwg.mxu0
  %v703 = vadd.f32 %v248, %v698
  %v704 = vtanh.pop %v703
  %706 = vrot.lane.b32.xlu0 %v655, 32
  %v707 = vpop.permute.xlu0 %706
  %v709 = vsel %vm272, %v704, %v707
  %v710 = vpack.c.bf16 %v709, %v709
  %v712 = vsel %vm397, %v710, 0
  %714 = vmatprep.subr.bf16.mxu0 0
  %715 = vmatpush1.bf16.msra.mxu0 %v268
  %716 = vmatprep.subr.bf16.mxu0 0
  %717 = vmatpush1.bf16.msra.mxu0 %v269
  %718 = vmatprep.subr.bf16.mxu0 0
  %719 = vmatpush1.bf16.msra.mxu0 %v393
  %720 = vmatprep.subr.bf16.mxu0 0
  %721 = vmatpush1.bf16.msra.mxu0 %v394
  %722 = vmatprep.subr.bf16.mxu0 0
  %723 = vmatpush1.bf16.msra.mxu0 0
  %724 = vmatprep.subr.bf16.mxu0 0
  %725 = vmatpush1.bf16.msra.mxu0 0
  %726 = vmatprep.subr.bf16.mxu0 0
  %727 = vmatpush1.bf16.msra.mxu0 0
  %728 = vmatprep.subr.bf16.mxu0 0
  %729 = vmatpush1.bf16.msra.mxu0 0
  %730 = vmatprep.subr.bf16.mxu0 0
  %731 = vmatpush1.bf16.msra.mxu0 0
  %732 = vmatprep.subr.bf16.mxu0 0
  %733 = vmatpush1.bf16.msra.mxu0 0
  %734 = vmatprep.subr.bf16.mxu0 0
  %735 = vmatpush1.bf16.msra.mxu0 0
  %736 = vmatprep.subr.bf16.mxu0 0
  %737 = vmatpush1.bf16.msra.mxu0 0
  %738 = vmatprep.subr.bf16.mxu0 0
  %739 = vmatpush1.bf16.msra.mxu0 0
  %740 = vmatprep.subr.bf16.mxu0 0
  %741 = vmatpush1.bf16.msra.mxu0 0
  %742 = vmatprep.subr.bf16.mxu0 0
  %743 = vmatpush1.bf16.msra.mxu0 0
  %744 = vmatprep.subr.bf16.mxu0 0
  %745 = vmatpush1.bf16.msra.mxu0 0
  %746 = vmatprep.mubr.bf16.mxu0 0
  %747 = vmatmul.mubr.bf16.gmra.mrb[0].mxu0 %v712
  %v748 = vpop.f32.mrb[0].mxu0
  %v749 = vadd.f32 %v257, %v748
  %v750 = vpop.f32.mrb[0].mxu0
  %v751 = vpop.f32.mrb[0].mxu0
  %v752 = vpop.f32.mrb[0].mxu0
  %753 = vdwg.mxu0
  %v754 = vtanh.pop %v749
  %v755 = vpack.c.bf16 %v754, %v754
  %v760 = vunpack.c.l.b16 %v57
  %v761 = vunpack.c.l.b16 %v58
  %v762 = vunpack.c.l.b16 %v59
  %v763 = vunpack.c.l.b16 %v60
  %v764 = vpack.c.b16 %v761, %v760
  %v765 = vpack.c.b16 %v763, %v762
  %769 = vrot.lane.b32.xlu0 %v250, 96
  %v770 = vpop.permute.xlu0 %769
  %v773 = vsel %vm272, %v755, 0
  %775 = vmatprep.subr.bf16.mxu0 0
  %776 = vmatpush1.bf16.msra.mxu0 %v764
  %777 = vmatprep.subr.bf16.mxu0 0
  %778 = vmatpush1.bf16.msra.mxu0 %v765
  %779 = vmatprep.subr.bf16.mxu0 0
  %780 = vmatpush1.bf16.msra.mxu0 0
  %781 = vmatprep.subr.bf16.mxu0 0
  %782 = vmatpush1.bf16.msra.mxu0 0
  %783 = vmatprep.subr.bf16.mxu0 0
  %784 = vmatpush1.bf16.msra.mxu0 0
  %785 = vmatprep.subr.bf16.mxu0 0
  %786 = vmatpush1.bf16.msra.mxu0 0
  %787 = vmatprep.subr.bf16.mxu0 0
  %788 = vmatpush1.bf16.msra.mxu0 0
  %789 = vmatprep.subr.bf16.mxu0 0
  %790 = vmatpush1.bf16.msra.mxu0 0
  %791 = vmatprep.subr.bf16.mxu0 0
  %792 = vmatpush1.bf16.msra.mxu0 0
  %793 = vmatprep.subr.bf16.mxu0 0
  %794 = vmatpush1.bf16.msra.mxu0 0
  %795 = vmatprep.subr.bf16.mxu0 0
  %796 = vmatpush1.bf16.msra.mxu0 0
  %797 = vmatprep.subr.bf16.mxu0 0
  %798 = vmatpush1.bf16.msra.mxu0 0
  %799 = vmatprep.subr.bf16.mxu0 0
  %800 = vmatpush1.bf16.msra.mxu0 0
  %801 = vmatprep.subr.bf16.mxu0 0
  %802 = vmatpush1.bf16.msra.mxu0 0
  %803 = vmatprep.subr.bf16.mxu0 0
  %804 = vmatpush1.bf16.msra.mxu0 0
  %805 = vmatprep.subr.bf16.mxu0 0
  %806 = vmatpush1.bf16.msra.mxu0 0
  %807 = vmatprep.mubr.bf16.mxu0 0
  %808 = vmatmul.mubr.bf16.gmra.mrb[0].mxu0 %v773
  %v809 = vpop.f32.mrb[0].mxu0
  %v810 = vadd.f32 %v770, %v809
  %v811 = vpop.f32.mrb[0].mxu0
  %v812 = vpop.f32.mrb[0].mxu0
  %v813 = vpop.f32.mrb[0].mxu0
  %814 = vdwg.mxu0
  %v815 = vmax.f32 %v810, 0.0
  %v816 = vpack.c.bf16 %v815, %v815
  %v817 = vlaneseq
  %v818 = vshrl.u32 %v817, 7
  %v819 = vsub.s32 2, %v818
  %v820 = vrot.slane %v77, %v819
  %v829 = vunpack.c.l.b16 %v61
  %v830 = vunpack.c.l.b16 %v62
  %v831 = vunpack.c.l.b16 %v63
  %v832 = vunpack.c.l.b16 %v64
  %v833 = vunpack.c.l.b16 %v65
  %v834 = vunpack.c.l.b16 %v66
  %v835 = vunpack.c.l.b16 %v67
  %v836 = vunpack.c.l.b16 %v68
  %v837 = vpack.c.b16 %v830, %v829
  %v838 = vpack.c.b16 %v832, %v831
  %v839 = vpack.c.b16 %v834, %v833
  %v840 = vpack.c.b16 %v836, %v835
  %v846 = vsel %vm397, %v816, 0
  %848 = vmatprep.subr.bf16.mxu0 0
  %849 = vmatpush1.bf16.msra.mxu0 %v837
  %850 = vmatprep.subr.bf16.mxu0 0
  %851 = vmatpush1.bf16.msra.mxu0 %v838
  %852 = vmatprep.subr.bf16.mxu0 0
  %853 = vmatpush1.bf16.msra.mxu0 %v839
  %854 = vmatprep.subr.bf16.mxu0 0
  %855 = vmatpush1.bf16.msra.mxu0 %v840
  %856 = vmatprep.subr.bf16.mxu0 0
  %857 = vmatpush1.bf16.msra.mxu0 0
  %858 = vmatprep.subr.bf16.mxu0 0
  %859 = vmatpush1.bf16.msra.mxu0 0
  %860 = vmatprep.subr.bf16.mxu0 0
  %861 = vmatpush1.bf16.msra.mxu0 0
  %862 = vmatprep.subr.bf16.mxu0 0
  %863 = vmatpush1.bf16.msra.mxu0 0
  %864 = vmatprep.subr.bf16.mxu0 0
  %865 = vmatpush1.bf16.msra.mxu0 0
  %866 = vmatprep.subr.bf16.mxu0 0
  %867 = vmatpush1.bf16.msra.mxu0 0
  %868 = vmatprep.subr.bf16.mxu0 0
  %869 = vmatpush1.bf16.msra.mxu0 0
  %870 = vmatprep.subr.bf16.mxu0 0
  %871 = vmatpush1.bf16.msra.mxu0 0
  %872 = vmatprep.subr.bf16.mxu0 0
  %873 = vmatpush1.bf16.msra.mxu0 0
  %874 = vmatprep.subr.bf16.mxu0 0
  %875 = vmatpush1.bf16.msra.mxu0 0
  %876 = vmatprep.subr.bf16.mxu0 0
  %877 = vmatpush1.bf16.msra.mxu0 0
  %878 = vmatprep.subr.bf16.mxu0 0
  %879 = vmatpush1.bf16.msra.mxu0 0
  %880 = vmatprep.mubr.bf16.mxu0 0
  %881 = vmatmul.mubr.bf16.gmra.mrb[0].mxu0 %v846
  %v882 = vpop.f32.mrb[0].mxu0
  %v883 = vadd.f32 %v820, %v882
  %v884 = vpop.f32.mrb[0].mxu0
  %v885 = vpop.f32.mrb[0].mxu0
  %v886 = vpop.f32.mrb[0].mxu0
  %887 = vdwg.mxu0
  %v888 = vmax.f32 %v883, 0.0
  %v889 = vpack.c.bf16 %v888, %v888
  %v898 = vunpack.c.l.b16 %v69
  %v899 = vunpack.c.l.b16 %v70
  %v900 = vunpack.c.l.b16 %v71
  %v901 = vunpack.c.l.b16 %v72
  %v902 = vunpack.c.l.b16 %v73
  %v903 = vunpack.c.l.b16 %v74
  %v904 = vunpack.c.l.b16 %v75
  %v905 = vunpack.c.l.b16 %v76
  %v906 = vpack.c.b16 %v899, %v898
  %v907 = vpack.c.b16 %v901, %v900
  %v908 = vpack.c.b16 %v903, %v902
  %v909 = vpack.c.b16 %v905, %v904
  %v915 = vsel %vm397, %v889, 0
  %917 = vmatprep.subr.bf16.mxu0 0
  %918 = vmatpush1.bf16.msra.mxu0 %v906
  %919 = vmatprep.subr.bf16.mxu0 0
  %920 = vmatpush1.bf16.msra.mxu0 %v907
  %921 = vmatprep.subr.bf16.mxu0 0
  %922 = vmatpush1.bf16.msra.mxu0 %v908
  %923 = vmatprep.subr.bf16.mxu0 0
  %924 = vmatpush1.bf16.msra.mxu0 %v909
  %925 = vmatprep.subr.bf16.mxu0 0
  %926 = vmatpush1.bf16.msra.mxu0 0
  %927 = vmatprep.subr.bf16.mxu0 0
  %928 = vmatpush1.bf16.msra.mxu0 0
  %929 = vmatprep.subr.bf16.mxu0 0
  %930 = vmatpush1.bf16.msra.mxu0 0
  %931 = vmatprep.subr.bf16.mxu0 0
  %932 = vmatpush1.bf16.msra.mxu0 0
  %933 = vmatprep.subr.bf16.mxu0 0
  %934 = vmatpush1.bf16.msra.mxu0 0
  %935 = vmatprep.subr.bf16.mxu0 0
  %936 = vmatpush1.bf16.msra.mxu0 0
  %937 = vmatprep.subr.bf16.mxu0 0
  %938 = vmatpush1.bf16.msra.mxu0 0
  %939 = vmatprep.subr.bf16.mxu0 0
  %940 = vmatpush1.bf16.msra.mxu0 0
  %941 = vmatprep.subr.bf16.mxu0 0
  %942 = vmatpush1.bf16.msra.mxu0 0
  %943 = vmatprep.subr.bf16.mxu0 0
  %944 = vmatpush1.bf16.msra.mxu0 0
  %945 = vmatprep.subr.bf16.mxu0 0
  %946 = vmatpush1.bf16.msra.mxu0 0
  %947 = vmatprep.subr.bf16.mxu0 0
  %948 = vmatpush1.bf16.msra.mxu0 0
  %949 = vmatprep.mubr.bf16.mxu0 0
  %950 = vmatmul.mubr.bf16.gmra.mrb[0].mxu0 %v915
  %v951 = vpop.f32.mrb[0].mxu0
  %v952 = vadd.f32 0.0, %v951
  %v953 = vpop.f32.mrb[0].mxu0
  %v954 = vpop.f32.mrb[0].mxu0
  %v955 = vpop.f32.mrb[0].mxu0
  %956 = vdwg.mxu0
  %v957 = vlaneseq
  %v958 = vshrl.u32 %v957, 7
  %v959 = vsub.s32 3, %v958
  %v960 = vrot.slane %v77, %v959
  %v961 = vadd.f32 %v952, %v960
  %v962 = vtanh.pop %v961
  %v963 = vadd.f32 %v962, 1.0
  %v964 = vmul.f32 %v963, 3.0
  %v965 = vadd.f32 %v964, -4.0
  %v966 = vmul.f32 %v965, 1.442695
  %v967 = vpow.pop %v966
  %vm968 = vcmask 64512
  %v969 = vsel %vm968, %v961, %v967
  %vm970 = vcmask 130048
  %971 = vst.msk [vmem:[%s5] sm:$0xff] %vm970, %v969
  // Predicated region
  $region22: #{actor_forward.1} parent=0 // pred_check
    _
  $region23: #{actor_forward.1} parent=0 // pred_check_branch
    %973 = sbr.rel (0) target = $region25
  $region24: #{actor_forward.1} parent=0 // pred_region
    _
  $region25: #{actor_forward.1} parent=0 // pred_fallthru
    _
  // Predicated region
  $region26: #{actor_forward.1} parent=0 // pred_check
    _
  $region27: #{actor_forward.1} parent=0 // pred_check_branch
    %975 = sbr.rel (0) target = $region29
  $region28: #{actor_forward.1} parent=0 // pred_region
    _
  $region29: #{actor_forward.1} parent=0 // pred_fallthru
    _

</llo_original>
